<compile_context>
chip_gen: v5e
topology: v5e:2x2
jax: 0.10.0
libtpu: 0.0.40
codegen_flags: <defaults>
</compile_context>

<pallas_src>
import functools

import jax
import jax.numpy as jnp
import numpy as np
from jax import lax
from jax.experimental import pallas as pl
from jax.experimental.pallas import tpu as pltpu


def _resblock_kernel(x_ref, mask_ref, w1_ref, b1_ref, w2_ref, b2_ref, o_ref,
                     *, tap_offsets):
    """Fused conv3x3 -> ReLU -> conv3x3 -> +identity for one batch element.

    x_ref:    (1, C, HW)  unpadded image; channels on sublanes, flat spatial on lanes
    mask_ref: (9, HW)     per-tap validity masks (0 where the tap would read outside)
    w1_ref/w2_ref: (C, 9*C) weights, column index = (kh*3 + kw)*C + cin
    b1_ref/b2_ref: (C, 1)
    o_ref:    (1, C, HW)
    """
    hw = x_ref.shape[2]

    x = x_ref[0]                                   # (C, HW) f32
    masks = mask_ref[...]                          # (9, HW)
    mask_rows = [masks[t:t + 1, :] for t in range(len(tap_offsets))]  # (1, HW) each

    def conv3x3(inp, w, b):
        # Build the (9*C, HW) im2col slab from lane rolls of `inp`; the per-tap
        # masks zero every contribution that would have come from the zero pad,
        # so no padded buffer is ever needed (also handles conv2's halo).
        cols = []
        for t, off in enumerate(tap_offsets):
            shifted = inp if off == 0 else pltpu.roll(inp, (-off) % hw, axis=1)
            cols.append(shifted * mask_rows[t])
        col = jnp.concatenate(cols, axis=0)        # (9*C, HW)
        # One MXU matmul per conv: (C, 9C) @ (9C, HW) with f32 accumulation.
        return jnp.dot(w, col, preferred_element_type=jnp.float32) + b

    y = jnp.maximum(conv3x3(x, w1_ref[...], b1_ref[...]), 0.0)   # conv1 + bias + ReLU
    out = conv3x3(y, w2_ref[...], b2_ref[...]) + x               # conv2 + bias + identity
    o_ref[0] = out.astype(o_ref.dtype)


def resblock_pallas(x_nchw, w1, b1, w2, b2):
    """x_nchw: (N, C, H, W); w1/w2: (C, C, 3, 3) PyTorch OIHW layout; b1/b2: (C,)."""
    N, C, H, W = x_nchw.shape
    HW = H * W

    # Free layout change: NCHW -> (N, C, H*W). No transpose, no pad, no extra HBM pass.
    x_flat = x_nchw.reshape(N, C, HW).astype(jnp.float32)

    # Flat lane offset of each 3x3 tap, t = kh*3 + kw.
    tap_offsets = tuple((kh - 1) * W + (kw - 1) for kh in range(3) for kw in range(3))

    # Per-tap validity masks over output positions (implements padding=1 borders).
    hh = np.arange(H)[:, None]
    ww = np.arange(W)[None, :]
    mask_np = np.stack([
        (((hh + kh - 1) >= 0) & ((hh + kh - 1) < H) &
         ((ww + kw - 1) >= 0) & ((ww + kw - 1) < W)).reshape(HW)
        for kh in range(3) for kw in range(3)
    ]).astype(np.float32)                                   # (9, HW)
    mask9 = jnp.asarray(mask_np)

    # OIHW -> (C_out, 9*C_in), column = (kh*3 + kw)*C_in + cin.
    def to_mat(w):
        return jnp.transpose(w, (0, 2, 3, 1)).reshape(C, 9 * C).astype(jnp.float32)

    w1m, w2m = to_mat(w1), to_mat(w2)
    b1m = b1.reshape(C, 1).astype(jnp.float32)
    b2m = b2.reshape(C, 1).astype(jnp.float32)

    kernel = functools.partial(_resblock_kernel, tap_offsets=tap_offsets)

    out_flat = pl.pallas_call(
        kernel,
        out_shape=jax.ShapeDtypeStruct((N, C, HW), jnp.float32),
        grid_spec=pltpu.PrefetchScalarGridSpec(
            num_scalar_prefetch=0,
            grid=(N,),
            in_specs=[
                pl.BlockSpec((1, C, HW), lambda n: (n, 0, 0)),   # image slab
                pl.BlockSpec((9, HW), lambda n: (0, 0)),         # tap masks (resident)
                pl.BlockSpec((C, 9 * C), lambda n: (0, 0)),      # w1 (resident)
                pl.BlockSpec((C, 1), lambda n: (0, 0)),          # b1
                pl.BlockSpec((C, 9 * C), lambda n: (0, 0)),      # w2
                pl.BlockSpec((C, 1), lambda n: (0, 0)),          # b2
            ],
            out_specs=pl.BlockSpec((1, C, HW), lambda n: (n, 0, 0)),
        ),
        compiler_params=pltpu.CompilerParams(
            dimension_semantics=("parallel",),
            vmem_limit_bytes=32 * 1024 * 1024,
        ),
    )(x_flat, mask9, w1m, b1m, w2m, b2m)

    # Free reshape back to NCHW.
    return out_flat.reshape(N, C, H, W)


def _resblock_ref(x_nchw, w1, b1, w2, b2):
    """Pure-JAX reference (matches PyTorch Conv2d semantics, NCHW)."""
    dn = lax.conv_dimension_numbers(x_nchw.shape, w1.shape, ('NCHW', 'OIHW', 'NCHW'))
    out = lax.conv_general_dilated(x_nchw, w1, (1, 1), ((1, 1), (1, 1)),
                                   dimension_numbers=dn)
    out = out + b1.reshape(1, -1, 1, 1)
    out = jnp.maximum(out, 0.0)
    out = lax.conv_general_dilated(out, w2, (1, 1), ((1, 1), (1, 1)),
                                   dimension_numbers=dn)
    out = out + b2.reshape(1, -1, 1, 1)
    return out + x_nchw


if __name__ == "__main__":
    N, C, H, W = 2, 4, 16, 16
    key = jax.random.PRNGKey(0)
    kx, kw1, kb1, kw2, kb2 = jax.random.split(key, 5)

    x = jax.random.normal(kx, (N, C, H, W), dtype=jnp.float32)
    # Deterministic "Kaiming-ish" init matching nn.Conv2d parameter shapes.
    fan_in = C * 3 * 3
    bound = 1.0 / jnp.sqrt(fan_in)
    w1 = jax.random.uniform(kw1, (C, C, 3, 3), minval=-bound, maxval=bound, dtype=jnp.float32)
    b1 = jax.random.uniform(kb1, (C,), minval=-bound, maxval=bound, dtype=jnp.float32)
    w2 = jax.random.uniform(kw2, (C, C, 3, 3), minval=-bound, maxval=bound, dtype=jnp.float32)
    b2 = jax.random.uniform(kb2, (C,), minval=-bound, maxval=bound, dtype=jnp.float32)

    out = resblock_pallas(x, w1, b1, w2, b2)
    out = jax.block_until_ready(out)

    ref = jax.block_until_ready(_resblock_ref(x, w1, b1, w2, b2))
    assert out.shape == (N, C, H, W)
    assert jnp.max(jnp.abs(out - ref)) < 1e-4, "mismatch vs reference conv"

    print("KERNEL_OK")
</pallas_src>

<mosaic_0001>
module attributes {stable_mosaic.version = 11 : i64} {
  func.func @_resblock_kernel(%arg0: i32, %arg1: memref<1x4x256xf32, #tpu.memory_space<vmem>>, %arg2: memref<9x256xf32, #tpu.memory_space<vmem>>, %arg3: memref<4x36xf32, #tpu.memory_space<vmem>>, %arg4: memref<4x1xf32, #tpu.memory_space<vmem>>, %arg5: memref<4x36xf32, #tpu.memory_space<vmem>>, %arg6: memref<4x1xf32, #tpu.memory_space<vmem>>, %arg7: memref<1x4x256xf32, #tpu.memory_space<vmem>>) attributes {dimension_semantics = [#tpu.dimension_semantics<parallel>], iteration_bounds = array<i64: 2>, scalar_prefetch = 0 : i64, scratch_operands = 0 : i64, tpu.core_type = #tpu.core_type<tc>, window_params = [{transform_indices = @transform_0, window_bounds = array<i64: 1, 4, 256>}, {pipeline_mode = #tpu.pipeline_mode<synchronous>, transform_indices = @transform_1, window_bounds = array<i64: 9, 256>}, {pipeline_mode = #tpu.pipeline_mode<synchronous>, transform_indices = @transform_2, window_bounds = array<i64: 4, 36>}, {pipeline_mode = #tpu.pipeline_mode<synchronous>, transform_indices = @transform_3, window_bounds = array<i64: 4, 1>}, {pipeline_mode = #tpu.pipeline_mode<synchronous>, transform_indices = @transform_4, window_bounds = array<i64: 4, 36>}, {pipeline_mode = #tpu.pipeline_mode<synchronous>, transform_indices = @transform_5, window_bounds = array<i64: 4, 1>}, {transform_indices = @transform_6, window_bounds = array<i64: 1, 4, 256>}]} {
    %c0 = arith.constant 0 : index
    %c0_0 = arith.constant 0 : index
    %c0_1 = arith.constant 0 : index
    %0 = vector.load %arg1[%c0, %c0_0, %c0_1] : memref<1x4x256xf32, #tpu.memory_space<vmem>>, vector<1x4x256xf32>
    %1 = vector.shape_cast %0 : vector<1x4x256xf32> to vector<4x256xf32>
    %c0_2 = arith.constant 0 : index
    %c0_3 = arith.constant 0 : index
    %2 = vector.load %arg2[%c0_2, %c0_3] : memref<9x256xf32, #tpu.memory_space<vmem>>, vector<9x256xf32>
    %3 = vector.extract_strided_slice %2 {offsets = [0, 0], sizes = [1, 256], strides = [1, 1]} : vector<9x256xf32> to vector<1x256xf32>
    %4 = vector.extract_strided_slice %2 {offsets = [1, 0], sizes = [1, 256], strides = [1, 1]} : vector<9x256xf32> to vector<1x256xf32>
    %5 = vector.extract_strided_slice %2 {offsets = [2, 0], sizes = [1, 256], strides = [1, 1]} : vector<9x256xf32> to vector<1x256xf32>
    %6 = vector.extract_strided_slice %2 {offsets = [3, 0], sizes = [1, 256], strides = [1, 1]} : vector<9x256xf32> to vector<1x256xf32>
    %7 = vector.extract_strided_slice %2 {offsets = [4, 0], sizes = [1, 256], strides = [1, 1]} : vector<9x256xf32> to vector<1x256xf32>
    %8 = vector.extract_strided_slice %2 {offsets = [5, 0], sizes = [1, 256], strides = [1, 1]} : vector<9x256xf32> to vector<1x256xf32>
    %9 = vector.extract_strided_slice %2 {offsets = [6, 0], sizes = [1, 256], strides = [1, 1]} : vector<9x256xf32> to vector<1x256xf32>
    %10 = vector.extract_strided_slice %2 {offsets = [7, 0], sizes = [1, 256], strides = [1, 1]} : vector<9x256xf32> to vector<1x256xf32>
    %11 = vector.extract_strided_slice %2 {offsets = [8, 0], sizes = [1, 256], strides = [1, 1]} : vector<9x256xf32> to vector<1x256xf32>
    %c0_4 = arith.constant 0 : index
    %c0_5 = arith.constant 0 : index
    %12 = vector.load %arg3[%c0_4, %c0_5] : memref<4x36xf32, #tpu.memory_space<vmem>>, vector<4x36xf32>
    %c0_6 = arith.constant 0 : index
    %c0_7 = arith.constant 0 : index
    %13 = vector.load %arg4[%c0_6, %c0_7] : memref<4x1xf32, #tpu.memory_space<vmem>>, vector<4x1xf32>
    %c17_i32 = arith.constant 17 : i32
    %14 = tpu.dynamic_rotate %1 by %c17_i32 dim 1 : vector<4x256xf32>, i32 -> vector<4x256xf32>
    %15 = vector.broadcast %3 : vector<1x256xf32> to vector<4x256xf32>
    %16 = arith.mulf %14, %15 : vector<4x256xf32>
    %c16_i32 = arith.constant 16 : i32
    %17 = tpu.dynamic_rotate %1 by %c16_i32 dim 1 : vector<4x256xf32>, i32 -> vector<4x256xf32>
    %18 = vector.broadcast %4 : vector<1x256xf32> to vector<4x256xf32>
    %19 = arith.mulf %17, %18 : vector<4x256xf32>
    %c15_i32 = arith.constant 15 : i32
    %20 = tpu.dynamic_rotate %1 by %c15_i32 dim 1 : vector<4x256xf32>, i32 -> vector<4x256xf32>
    %21 = vector.broadcast %5 : vector<1x256xf32> to vector<4x256xf32>
    %22 = arith.mulf %20, %21 : vector<4x256xf32>
    %c1_i32 = arith.constant 1 : i32
    %23 = tpu.dynamic_rotate %1 by %c1_i32 dim 1 : vector<4x256xf32>, i32 -> vector<4x256xf32>
    %24 = vector.broadcast %6 : vector<1x256xf32> to vector<4x256xf32>
    %25 = arith.mulf %23, %24 : vector<4x256xf32>
    %26 = vector.broadcast %7 : vector<1x256xf32> to vector<4x256xf32>
    %27 = arith.mulf %1, %26 : vector<4x256xf32>
    %c255_i32 = arith.constant 255 : i32
    %28 = tpu.dynamic_rotate %1 by %c255_i32 dim 1 : vector<4x256xf32>, i32 -> vector<4x256xf32>
    %29 = vector.broadcast %8 : vector<1x256xf32> to vector<4x256xf32>
    %30 = arith.mulf %28, %29 : vector<4x256xf32>
    %c241_i32 = arith.constant 241 : i32
    %31 = tpu.dynamic_rotate %1 by %c241_i32 dim 1 : vector<4x256xf32>, i32 -> vector<4x256xf32>
    %32 = vector.broadcast %9 : vector<1x256xf32> to vector<4x256xf32>
    %33 = arith.mulf %31, %32 : vector<4x256xf32>
    %c240_i32 = arith.constant 240 : i32
    %34 = tpu.dynamic_rotate %1 by %c240_i32 dim 1 : vector<4x256xf32>, i32 -> vector<4x256xf32>
    %35 = vector.broadcast %10 : vector<1x256xf32> to vector<4x256xf32>
    %36 = arith.mulf %34, %35 : vector<4x256xf32>
    %c239_i32 = arith.constant 239 : i32
    %37 = tpu.dynamic_rotate %1 by %c239_i32 dim 1 : vector<4x256xf32>, i32 -> vector<4x256xf32>
    %38 = vector.broadcast %11 : vector<1x256xf32> to vector<4x256xf32>
    %39 = arith.mulf %37, %38 : vector<4x256xf32>
    %40 = tpu.concatenate %16, %19, %22, %25, %27, %30, %33, %36, %39 in 0 : vector<4x256xf32>, vector<4x256xf32>, vector<4x256xf32>, vector<4x256xf32>, vector<4x256xf32>, vector<4x256xf32>, vector<4x256xf32>, vector<4x256xf32>, vector<4x256xf32> -> vector<36x256xf32>
    %cst = arith.constant dense<0.000000e+00> : vector<4x256xf32>
    %41 = tpu.matmul %12, %40, %cst {dimension_numbers = #tpu.dot_dimension_numbers<[1], [0], [0], [1], [0, 0, 1, 1], [], []>} : vector<4x36xf32>, vector<36x256xf32>, vector<4x256xf32> -> vector<4x256xf32>
    %42 = vector.broadcast %13 : vector<4x1xf32> to vector<4x256xf32>
    %43 = arith.addf %41, %42 : vector<4x256xf32>
    %cst_8 = arith.constant 0.000000e+00 : f32
    %44 = vector.broadcast %cst_8 : f32 to vector<4x256xf32>
    %45 = arith.maximumf %43, %44 : vector<4x256xf32>
    %c0_9 = arith.constant 0 : index
    %c0_10 = arith.constant 0 : index
    %46 = vector.load %arg5[%c0_9, %c0_10] : memref<4x36xf32, #tpu.memory_space<vmem>>, vector<4x36xf32>
    %c0_11 = arith.constant 0 : index
    %c0_12 = arith.constant 0 : index
    %47 = vector.load %arg6[%c0_11, %c0_12] : memref<4x1xf32, #tpu.memory_space<vmem>>, vector<4x1xf32>
    %c17_i32_13 = arith.constant 17 : i32
    %48 = tpu.dynamic_rotate %45 by %c17_i32_13 dim 1 : vector<4x256xf32>, i32 -> vector<4x256xf32>
    %49 = vector.broadcast %3 : vector<1x256xf32> to vector<4x256xf32>
    %50 = arith.mulf %48, %49 : vector<4x256xf32>
    %c16_i32_14 = arith.constant 16 : i32
    %51 = tpu.dynamic_rotate %45 by %c16_i32_14 dim 1 : vector<4x256xf32>, i32 -> vector<4x256xf32>
    %52 = vector.broadcast %4 : vector<1x256xf32> to vector<4x256xf32>
    %53 = arith.mulf %51, %52 : vector<4x256xf32>
    %c15_i32_15 = arith.constant 15 : i32
    %54 = tpu.dynamic_rotate %45 by %c15_i32_15 dim 1 : vector<4x256xf32>, i32 -> vector<4x256xf32>
    %55 = vector.broadcast %5 : vector<1x256xf32> to vector<4x256xf32>
    %56 = arith.mulf %54, %55 : vector<4x256xf32>
    %c1_i32_16 = arith.constant 1 : i32
    %57 = tpu.dynamic_rotate %45 by %c1_i32_16 dim 1 : vector<4x256xf32>, i32 -> vector<4x256xf32>
    %58 = vector.broadcast %6 : vector<1x256xf32> to vector<4x256xf32>
    %59 = arith.mulf %57, %58 : vector<4x256xf32>
    %60 = vector.broadcast %7 : vector<1x256xf32> to vector<4x256xf32>
    %61 = arith.mulf %45, %60 : vector<4x256xf32>
    %c255_i32_17 = arith.constant 255 : i32
    %62 = tpu.dynamic_rotate %45 by %c255_i32_17 dim 1 : vector<4x256xf32>, i32 -> vector<4x256xf32>
    %63 = vector.broadcast %8 : vector<1x256xf32> to vector<4x256xf32>
    %64 = arith.mulf %62, %63 : vector<4x256xf32>
    %c241_i32_18 = arith.constant 241 : i32
    %65 = tpu.dynamic_rotate %45 by %c241_i32_18 dim 1 : vector<4x256xf32>, i32 -> vector<4x256xf32>
    %66 = vector.broadcast %9 : vector<1x256xf32> to vector<4x256xf32>
    %67 = arith.mulf %65, %66 : vector<4x256xf32>
    %c240_i32_19 = arith.constant 240 : i32
    %68 = tpu.dynamic_rotate %45 by %c240_i32_19 dim 1 : vector<4x256xf32>, i32 -> vector<4x256xf32>
    %69 = vector.broadcast %10 : vector<1x256xf32> to vector<4x256xf32>
    %70 = arith.mulf %68, %69 : vector<4x256xf32>
    %c239_i32_20 = arith.constant 239 : i32
    %71 = tpu.dynamic_rotate %45 by %c239_i32_20 dim 1 : vector<4x256xf32>, i32 -> vector<4x256xf32>
    %72 = vector.broadcast %11 : vector<1x256xf32> to vector<4x256xf32>
    %73 = arith.mulf %71, %72 : vector<4x256xf32>
    %74 = tpu.concatenate %50, %53, %56, %59, %61, %64, %67, %70, %73 in 0 : vector<4x256xf32>, vector<4x256xf32>, vector<4x256xf32>, vector<4x256xf32>, vector<4x256xf32>, vector<4x256xf32>, vector<4x256xf32>, vector<4x256xf32>, vector<4x256xf32> -> vector<36x256xf32>
    %cst_21 = arith.constant dense<0.000000e+00> : vector<4x256xf32>
    %75 = tpu.matmul %46, %74, %cst_21 {dimension_numbers = #tpu.dot_dimension_numbers<[1], [0], [0], [1], [0, 0, 1, 1], [], []>} : vector<4x36xf32>, vector<36x256xf32>, vector<4x256xf32> -> vector<4x256xf32>
    %76 = vector.broadcast %47 : vector<4x1xf32> to vector<4x256xf32>
    %77 = arith.addf %75, %76 : vector<4x256xf32>
    %78 = arith.addf %77, %1 : vector<4x256xf32>
    %c0_22 = arith.constant 0 : index
    %c0_23 = arith.constant 0 : index
    %c0_24 = arith.constant 0 : index
    %79 = vector.load %arg7[%c0_22, %c0_23, %c0_24] : memref<1x4x256xf32, #tpu.memory_space<vmem>>, vector<1x4x256xf32>
    %80 = vector.shape_cast %79 : vector<1x4x256xf32> to vector<4x256xf32>
    %81 = vector.shape_cast %78 : vector<4x256xf32> to vector<1x4x256xf32>
    tpu.vector_store %arg7[%c0_22, %c0_23, %c0_24], %81 {strides = array<i32>} : memref<1x4x256xf32, #tpu.memory_space<vmem>>, vector<1x4x256xf32>,
    return
  }
  func.func @transform_0(%arg0: i32) -> (i32, i32, i32) {
    %c0_i32 = arith.constant 0 : i32
    %c0_i32_0 = arith.constant 0 : i32
    %c0_i32_1 = arith.constant 0 : i32
    return %arg0, %c0_i32, %c0_i32_0 : i32, i32, i32
  }
  func.func @transform_1(%arg0: i32) -> (i32, i32) {
    %c0_i32 = arith.constant 0 : i32
    %c0_i32_0 = arith.constant 0 : i32
    %c0_i32_1 = arith.constant 0 : i32
    return %c0_i32, %c0_i32_0 : i32, i32
  }
  func.func @transform_2(%arg0: i32) -> (i32, i32) {
    %c0_i32 = arith.constant 0 : i32
    %c0_i32_0 = arith.constant 0 : i32
    %c0_i32_1 = arith.constant 0 : i32
    return %c0_i32, %c0_i32_0 : i32, i32
  }
  func.func @transform_3(%arg0: i32) -> (i32, i32) {
    %c0_i32 = arith.constant 0 : i32
    %c0_i32_0 = arith.constant 0 : i32
    %c0_i32_1 = arith.constant 0 : i32
    return %c0_i32, %c0_i32_0 : i32, i32
  }
  func.func @transform_4(%arg0: i32) -> (i32, i32) {
    %c0_i32 = arith.constant 0 : i32
    %c0_i32_0 = arith.constant 0 : i32
    %c0_i32_1 = arith.constant 0 : i32
    return %c0_i32, %c0_i32_0 : i32, i32
  }
  func.func @transform_5(%arg0: i32) -> (i32, i32) {
    %c0_i32 = arith.constant 0 : i32
    %c0_i32_0 = arith.constant 0 : i32
    %c0_i32_1 = arith.constant 0 : i32
    return %c0_i32, %c0_i32_0 : i32, i32
  }
  func.func @transform_6(%arg0: i32) -> (i32, i32, i32) {
    %c0_i32 = arith.constant 0 : i32
    %c0_i32_0 = arith.constant 0 : i32
    %c0_i32_1 = arith.constant 0 : i32
    return %arg0, %c0_i32, %c0_i32_0 : i32, i32, i32
  }
}

</mosaic_0001>

<llo_original>
// kernel: tpu_custom_call.1
$region0: #{tpu_custom_call.1}
  #allocation0 [shape = 'u32[]', space=smem, size = 0x4, offset = 0x4, fixed_abs, tag = 'smem constant byte address 0x4 - core index']
  #allocation1 [shape = 'u32[72,128]{1,0:T(1,128)}', space=vmem, size = 0x9000, scoped, tag = 'internal scratch']
  %s0 = inlined_call_operand.hbm [shape: f32[2,4,256], index: 0, kind: input, shape index: {}]
  %s1 = inlined_call_operand.hbm [shape: f32[9,256], index: 1, kind: input, shape index: {}]
  %s2 = inlined_call_operand.vmem [shape: f32[4,36], index: 2, kind: input, shape index: {}]
  %s3 = inlined_call_operand.vmem [shape: f32[4,1], index: 3, kind: input, shape index: {}]
  %s4 = inlined_call_operand.vmem [shape: f32[4,36], index: 4, kind: input, shape index: {}]
  %s5 = inlined_call_operand.vmem [shape: f32[4,1], index: 5, kind: input, shape index: {}]
  %s6 = inlined_call_operand.hbm [shape: f32[2,4,256], index: 6, kind: output, shape index: {}]
  %s7 = sld [smem:[#allocation0]]
  $region65: #{tpu_custom_call.1} parent=0
    _
  %s9 = ssub.s32 1, %s7
  %s10 = scalar_select 0, %s9, %s7
  $region1: #{tpu_custom_call.1} parent=0
    #allocation2 [shape = 'u8[8192]{0}', space=vmem, size = 0x2000, scoped, tag = 'input window, operand 0']
    #allocation3 [shape = 's32[2]{0}', space=sflag, size = 0x8, scoped, tag = 'scoped memory for tpu_custom_call.1']
    #allocation4 [shape = 's32[2]{0}', space=sflag, size = 0x8, scoped, tag = 'scoped memory for tpu_custom_call.1']
    #allocation5 [shape = 'u8[16384]{0}', space=vmem, size = 0x4000, scoped, tag = 'input window, operand 1, single buffered']
    #allocation6 [shape = 's32[1]{0}', space=sflag, size = 0x4, scoped, tag = 'scoped memory for tpu_custom_call.1']
    #allocation7 [shape = 'u8[8192]{0}', space=vmem, size = 0x2000, scoped, tag = 'output window, operand 0']
    %11 = vsyncpa [#allocation3], 0
    %s12 = scalar_lea.sflag [#allocation3], 1
    %13 = vsyncpa %s12, 0
    %14 = vsyncpa [#allocation6], 0
    %15 = vsyncpa [#allocation4], 0
    %s16 = scalar_lea.sflag [#allocation4], 1
    %17 = vsyncpa %s16, 0
    loop: start=0, step=1, limit=4
    $region2: #{tpu_custom_call.1} parent=1 // loop_pre_header
      _
    $region3: #{tpu_custom_call.1} parent=1 // loop_header
      %s19 = sphi 0, %s23
      %p20 = scmp.ge.s32.totalorder %s19, 4
      %s29 = sphi 0, %s31
      %s32 = sphi 0, %s29
      %s33 = sphi 0, %s32
      %s49 = sphi 0, %s33
      %s53 = sphi 0, %s53
      %s55 = sphi 0, %s53
      %s56 = sphi 0, %s55
      %s70 = sphi 0, %s56
      %s74 = sphi 0, %s74
      %s76 = sphi 0, %s74
      %s77 = sphi 0, %s76
      %s91 = sphi 0, %s77
      %s95 = sphi 0, %s95
      %s97 = sphi 0, %s95
      %s98 = sphi 0, %s97
      %s112 = sphi 0, %s98
      %s116 = sphi 0, %s116
      %s118 = sphi 0, %s116
      %s119 = sphi 0, %s118
      %s133 = sphi 0, %s119
      %s137 = sphi 0, %s137
      %s139 = sphi 0, %s137
      %s140 = sphi 0, %s139
      %s154 = sphi 0, %s140
      %s160 = sphi 0, %s162
      %s163 = sphi 0, %s160
      %s164 = sphi 0, %s163
      %s180 = sphi 0, %s164
    $region4: #{tpu_custom_call.1} parent=1 // loop_header_branch
      %22 = sbr.rel (%p20) target = $region8
    $region5: #{tpu_custom_call.1} parent=1 // loop_body
      %s24 = ssub.s32 %s19, 1
      %s25 = ssub.s32 %s19, 2
      %s26 = sadd.s32 %s19, 1
      %s27 = ssub.s32 %s19, %s26
      %p28 = scmp.eq.s32.totalorder %s27, 0
      %s30 = sadd.s32 %s29, 1
      %s31 = scalar_select %p28, %s29, %s30
      %p34 = pneg %p28
      %p35 = scmp.eq.s32.totalorder %s19, 1
      %p36 = por %p34, %p35
      %p37 = scmp.ne.s32.totalorder %s29, %s32
      %p38 = scmp.eq.s32.totalorder %s19, 0
      %p39 = por %p37, %p38
      %p40 = scmp.ne.s32.totalorder %s29, %s32
      %p41 = scmp.eq.s32.totalorder %s24, 1
      %p42 = por %p40, %p41
      %p43 = scmp.ne.s32.totalorder %s32, %s33
      %p44 = scmp.eq.s32.totalorder %s24, 0
      %p45 = por %p43, %p44
      %p46 = scmp.ne.s32.totalorder %s32, %s33
      %p47 = scmp.eq.s32.totalorder %s25, 1
      %p48 = por %p46, %p47
      %p50 = scmp.ne.s32.totalorder %s33, %s49
      %p51 = scmp.eq.s32.totalorder %s25, 0
      %p52 = por %p50, %p51
      %s54 = sadd.s32 %s53, 1
      %p57 = scmp.eq.s32.totalorder %s19, 1
      %p58 = scmp.ne.s32.totalorder %s53, %s55
      %p59 = scmp.eq.s32.totalorder %s19, 0
      %p60 = por %p58, %p59
      %p61 = scmp.ne.s32.totalorder %s53, %s55
      %p62 = scmp.eq.s32.totalorder %s24, 1
      %p63 = por %p61, %p62
      %p64 = scmp.ne.s32.totalorder %s55, %s56
      %p65 = scmp.eq.s32.totalorder %s24, 0
      %p66 = por %p64, %p65
      %p67 = scmp.ne.s32.totalorder %s55, %s56
      %p68 = scmp.eq.s32.totalorder %s25, 1
      %p69 = por %p67, %p68
      %p71 = scmp.ne.s32.totalorder %s56, %s70
      %p72 = scmp.eq.s32.totalorder %s25, 0
      %p73 = por %p71, %p72
      %s75 = sadd.s32 %s74, 1
      %p78 = scmp.eq.s32.totalorder %s19, 1
      %p79 = scmp.ne.s32.totalorder %s74, %s76
      %p80 = scmp.eq.s32.totalorder %s19, 0
      %p81 = por %p79, %p80
      %p82 = scmp.ne.s32.totalorder %s74, %s76
      %p83 = scmp.eq.s32.totalorder %s24, 1
      %p84 = por %p82, %p83
      %p85 = scmp.ne.s32.totalorder %s76, %s77
      %p86 = scmp.eq.s32.totalorder %s24, 0
      %p87 = por %p85, %p86
      %p88 = scmp.ne.s32.totalorder %s76, %s77
      %p89 = scmp.eq.s32.totalorder %s25, 1
      %p90 = por %p88, %p89
      %p92 = scmp.ne.s32.totalorder %s77, %s91
      %p93 = scmp.eq.s32.totalorder %s25, 0
      %p94 = por %p92, %p93
      %s96 = sadd.s32 %s95, 1
      %p99 = scmp.eq.s32.totalorder %s19, 1
      %p100 = scmp.ne.s32.totalorder %s95, %s97
      %p101 = scmp.eq.s32.totalorder %s19, 0
      %p102 = por %p100, %p101
      %p103 = scmp.ne.s32.totalorder %s95, %s97
      %p104 = scmp.eq.s32.totalorder %s24, 1
      %p105 = por %p103, %p104
      %p106 = scmp.ne.s32.totalorder %s97, %s98
      %p107 = scmp.eq.s32.totalorder %s24, 0
      %p108 = por %p106, %p107
      %p109 = scmp.ne.s32.totalorder %s97, %s98
      %p110 = scmp.eq.s32.totalorder %s25, 1
      %p111 = por %p109, %p110
      %p113 = scmp.ne.s32.totalorder %s98, %s112
      %p114 = scmp.eq.s32.totalorder %s25, 0
      %p115 = por %p113, %p114
      %s117 = sadd.s32 %s116, 1
      %p120 = scmp.eq.s32.totalorder %s19, 1
      %p121 = scmp.ne.s32.totalorder %s116, %s118
      %p122 = scmp.eq.s32.totalorder %s19, 0
      %p123 = por %p121, %p122
      %p124 = scmp.ne.s32.totalorder %s116, %s118
      %p125 = scmp.eq.s32.totalorder %s24, 1
      %p126 = por %p124, %p125
      %p127 = scmp.ne.s32.totalorder %s118, %s119
      %p128 = scmp.eq.s32.totalorder %s24, 0
      %p129 = por %p127, %p128
      %p130 = scmp.ne.s32.totalorder %s118, %s119
      %p131 = scmp.eq.s32.totalorder %s25, 1
      %p132 = por %p130, %p131
      %p134 = scmp.ne.s32.totalorder %s119, %s133
      %p135 = scmp.eq.s32.totalorder %s25, 0
      %p136 = por %p134, %p135
      %s138 = sadd.s32 %s137, 1
      %p141 = scmp.eq.s32.totalorder %s19, 1
      %p142 = scmp.ne.s32.totalorder %s137, %s139
      %p143 = scmp.eq.s32.totalorder %s19, 0
      %p144 = por %p142, %p143
      %p145 = scmp.ne.s32.totalorder %s137, %s139
      %p146 = scmp.eq.s32.totalorder %s24, 1
      %p147 = por %p145, %p146
      %p148 = scmp.ne.s32.totalorder %s139, %s140
      %p149 = scmp.eq.s32.totalorder %s24, 0
      %p150 = por %p148, %p149
      %p151 = scmp.ne.s32.totalorder %s139, %s140
      %p152 = scmp.eq.s32.totalorder %s25, 1
      %p153 = por %p151, %p152
      %p155 = scmp.ne.s32.totalorder %s140, %s154
      %p156 = scmp.eq.s32.totalorder %s25, 0
      %p157 = por %p155, %p156
      %s158 = ssub.s32 %s19, %s26
      %p159 = scmp.eq.s32.totalorder %s158, 0
      %s161 = sadd.s32 %s160, 1
      %s162 = scalar_select %p159, %s160, %s161
      %p165 = pneg %p159
      %p166 = scmp.eq.s32.totalorder %s19, 1
      %p167 = por %p165, %p166
      %p168 = scmp.ne.s32.totalorder %s160, %s163
      %p169 = scmp.eq.s32.totalorder %s19, 0
      %p170 = por %p168, %p169
      %p171 = scmp.ne.s32.totalorder %s160, %s163
      %p172 = scmp.eq.s32.totalorder %s24, 1
      %p173 = por %p171, %p172
      %p174 = scmp.ne.s32.totalorder %s163, %s164
      %p175 = scmp.eq.s32.totalorder %s24, 0
      %p176 = por %p174, %p175
      %p177 = scmp.ne.s32.totalorder %s163, %s164
      %p178 = scmp.eq.s32.totalorder %s25, 1
      %p179 = por %p177, %p178
      %p181 = scmp.ne.s32.totalorder %s164, %s180
      %p182 = scmp.eq.s32.totalorder %s25, 0
      %p183 = por %p181, %p182
      %p184 = scmp.le.s32.totalorder 1, %s19
      %p185 = scmp.lt.s32.totalorder %s19, 3
      %p186 = pnand %p184, %p185
      %p187 = pneg %p186
      // Predicated region
      $region9: #{tpu_custom_call.1} parent=5 // pred_check
        _
      $region10: #{tpu_custom_call.1} parent=5 // pred_check_branch
        %189 = sbr.rel (%p186) target = $region12
      $region11: #{tpu_custom_call.1} parent=5 // pred_region
        %s190 = ssub.s32 %s19, 1
        // Predicated region
        $region13: #{tpu_custom_call.1} parent=11 // pred_check
          %p191 = pneg %p66
        $region14: #{tpu_custom_call.1} parent=11 // pred_check_branch
          %193 = sbr.rel (%p191) target = $region16
        $region15: #{tpu_custom_call.1} parent=11 // pred_region
          %195 = vsyncadd [#allocation6], 0
          %s196 = sshll.u32 %s1, 4
          %s197 = int_to_ptr.hbm [resolvable:$true] %s196
          %s198 = sshll.u32 [#allocation5], 4
          %s199 = int_to_ptr.vmem [resolvable:$true] %s198
          %204 = dma.hbm_to_vmem [thread:$0]  %s197, 512, %s199, [#allocation6], 256, 256, 16
        $region16: #{tpu_custom_call.1} parent=11 // pred_fallthru
          _
        // Predicated region
        $region17: #{tpu_custom_call.1} parent=11 // pred_check
          %p205 = pneg %p87
        $region18: #{tpu_custom_call.1} parent=11 // pred_check_branch
          %207 = sbr.rel (%p205) target = $region20
        $region19: #{tpu_custom_call.1} parent=11 // pred_region
          _
        $region20: #{tpu_custom_call.1} parent=11 // pred_fallthru
          _
        // Predicated region
        $region21: #{tpu_custom_call.1} parent=11 // pred_check
          %p208 = pneg %p108
        $region22: #{tpu_custom_call.1} parent=11 // pred_check_branch
          %210 = sbr.rel (%p208) target = $region24
        $region23: #{tpu_custom_call.1} parent=11 // pred_region
          _
        $region24: #{tpu_custom_call.1} parent=11 // pred_fallthru
          _
        // Predicated region
        $region25: #{tpu_custom_call.1} parent=11 // pred_check
          %p211 = pneg %p129
        $region26: #{tpu_custom_call.1} parent=11 // pred_check_branch
          %213 = sbr.rel (%p211) target = $region28
        $region27: #{tpu_custom_call.1} parent=11 // pred_region
          _
        $region28: #{tpu_custom_call.1} parent=11 // pred_fallthru
          _
        // Predicated region
        $region29: #{tpu_custom_call.1} parent=11 // pred_check
          %p214 = pneg %p150
        $region30: #{tpu_custom_call.1} parent=11 // pred_check_branch
          %216 = sbr.rel (%p214) target = $region32
        $region31: #{tpu_custom_call.1} parent=11 // pred_region
          _
        $region32: #{tpu_custom_call.1} parent=11 // pred_fallthru
          _
      $region12: #{tpu_custom_call.1} parent=5 // pred_fallthru
        _
      %p217 = scmp.lt.s32.totalorder %s19, 2
      // Predicated region
      $region33: #{tpu_custom_call.1} parent=5 // pred_check
        %p218 = pneg %p217
      $region34: #{tpu_custom_call.1} parent=5 // pred_check_branch
        %220 = sbr.rel (%p218) target = $region36
      $region35: #{tpu_custom_call.1} parent=5 // pred_region
        // Predicated region
        $region37: #{tpu_custom_call.1} parent=35 // pred_check
          %p221 = pneg %p39
        $region38: #{tpu_custom_call.1} parent=35 // pred_check_branch
          %223 = sbr.rel (%p221) target = $region40
        $region39: #{tpu_custom_call.1} parent=35 // pred_region
          %s224 = sand.u32 %s29, 1
          %s225 = scalar_lea.sflag [#allocation3], %s224
          %s226 = sand.u32 %s29, 1
          %s227 = smul.addr %s226, 8
          %s228 = scalar_lea.vmem [#allocation2], %s227
          %230 = vsyncadd %s225, 0
          %s231 = smul.addr %s19, 2
          %s232 = smul.addr %s231, 4
          %s233 = scalar_lea.hbm %s0, %s232
          %s235 = sshll.u32 %s233, 4
          %s236 = int_to_ptr.hbm [resolvable:$true] %s235
          %s237 = sshll.u32 %s228, 4
          %s238 = int_to_ptr.vmem [resolvable:$true] %s237
          %240 = dma.hbm_to_vmem [thread:$0]  %s236, 128, %s238, %s225
        $region40: #{tpu_custom_call.1} parent=35 // pred_fallthru
          _
      $region36: #{tpu_custom_call.1} parent=5 // pred_fallthru
        _
      %p241 = scmp.le.s32.totalorder 1, %s19
      %p242 = scmp.lt.s32.totalorder %s19, 3
      %p243 = pnand %p241, %p242
      %p244 = pneg %p243
      // Predicated region
      $region41: #{tpu_custom_call.1} parent=5 // pred_check
        _
      $region42: #{tpu_custom_call.1} parent=5 // pred_check_branch
        %246 = sbr.rel (%p243) target = $region44
      $region43: #{tpu_custom_call.1} parent=5 // pred_region
        %s247 = ssub.s32 %s19, 1
        %s248 = sand.u32 %s32, 1
        %s249 = scalar_lea.sflag [#allocation3], %s248
        %s250 = sand.u32 %s32, 1
        %s251 = smul.addr %s250, 8
        %s252 = scalar_lea.vmem [#allocation2], %s251
        // Predicated region
        $region45: #{tpu_custom_call.1} parent=43 // pred_check
          %p253 = pneg %p45
        $region46: #{tpu_custom_call.1} parent=43 // pred_check_branch
          %255 = sbr.rel (%p253) target = $region48
        $region47: #{tpu_custom_call.1} parent=43 // pred_region
          %257 = dma.done %s249, 128
        $region48: #{tpu_custom_call.1} parent=43 // pred_fallthru
          _
        // Predicated region
        $region49: #{tpu_custom_call.1} parent=43 // pred_check
          %p258 = pneg %p66
        $region50: #{tpu_custom_call.1} parent=43 // pred_check_branch
          %260 = sbr.rel (%p258) target = $region52
        $region51: #{tpu_custom_call.1} parent=43 // pred_region
          %262 = dma.done [#allocation6], 512
        $region52: #{tpu_custom_call.1} parent=43 // pred_fallthru
          _
        %s263 = sand.u32 %s32, 1
        %s264 = scalar_lea.sflag [#allocation3], %s263
        %s265 = sand.u32 %s32, 1
        %s266 = smul.addr %s265, 8
        %s267 = scalar_lea.vmem [#allocation2], %s266
        %p268 = pneg %p45
        %p269 = pneg %p42
        %p270 = pneg %p66
        %p271 = pneg %p63
        %p272 = pneg %p87
        %p273 = pneg %p84
        %p274 = pneg %p108
        %p275 = pneg %p105
        %p276 = pneg %p129
        %p277 = pneg %p126
        %p278 = pneg %p150
        %p279 = pneg %p147
        %p280 = pneg %p176
        %p281 = pneg %p173
        %s282 = sand.u32 %s163, 1
        %s283 = scalar_lea.sflag [#allocation4], %s282
        %s284 = sand.u32 %s163, 1
        %s285 = smul.addr %s284, 8
        %s286 = scalar_lea.vmem [#allocation7], %s285
        %v287 = vld [vmem:[%s252] sm:$0xff]
        %v288 = vld [vmem:[#allocation5] sm:$0xff]
        %v289 = vld [vmem:[#allocation5 + $0x8] sm:$0xff]
        %v290 = vld [vmem:[#allocation5 + $0x10] sm:$0x1]
        %v291 = vld [vmem:[#allocation5 + $0x18] sm:$0x1]
        %v292 = vld [vmem:[%s2] sm:$0xf]
        %v293 = vld [vmem:[%s3] sm:$0xf]
        %295 = vst [vmem:[#allocation1] ss:$2 sm:$0xff] %v287
        %v296 = vld.sshfl [vmem:[#allocation1] sm:$0xff pattern:$0x75316420]
        %v297 = vld.sshfl [vmem:[#allocation1 + $0x8] sm:$0xff pattern:$0x75316420]
        %300 = vrot.lane.b32.xlu0 %v296, 17
        %v301 = vpop.permute.xlu0 %300
        %302 = vrot.lane.b32.xlu0 %v297, 17
        %v303 = vpop.permute.xlu0 %302
        %v304 = vlaneseq
        %v305 = vand.u32 %v304, 127
        %vm306 = vcmp.lt.s32.totalorder %v305, 17
        %v307 = vsel %vm306, %v301, %v303
        %v308 = vsel %vm306, %v303, %v301
        %v309 = vperm.slane %v288, 0
        %v310 = vperm.slane %v289, 0
        %v311 = vmul.f32 %v308, %v309
        %v312 = vmul.f32 %v307, %v310
        %313 = vst [vmem:[#allocation1] ss:$2 sm:$0xff] %v287
        %v314 = vld.sshfl [vmem:[#allocation1] sm:$0xff pattern:$0x75316420]
        %v315 = vld.sshfl [vmem:[#allocation1 + $0x8] sm:$0xff pattern:$0x75316420]
        %318 = vrot.lane.b32.xlu0 %v314, 16
        %v319 = vpop.permute.xlu0 %318
        %320 = vrot.lane.b32.xlu0 %v315, 16
        %v321 = vpop.permute.xlu0 %320
        %vm322 = vcmp.lt.s32.totalorder %v305, 16
        %v323 = vsel %vm322, %v319, %v321
        %v324 = vsel %vm322, %v321, %v319
        %v325 = vperm.slane %v288, 1
        %v326 = vperm.slane %v289, 1
        %v327 = vmul.f32 %v324, %v325
        %v328 = vmul.f32 %v323, %v326
        %329 = vst [vmem:[#allocation1] ss:$2 sm:$0xff] %v287
        %v330 = vld.sshfl [vmem:[#allocation1] sm:$0xff pattern:$0x75316420]
        %v331 = vld.sshfl [vmem:[#allocation1 + $0x8] sm:$0xff pattern:$0x75316420]
        %334 = vrot.lane.b32.xlu0 %v330, 15
        %v335 = vpop.permute.xlu0 %334
        %336 = vrot.lane.b32.xlu0 %v331, 15
        %v337 = vpop.permute.xlu0 %336
        %vm338 = vcmp.lt.s32.totalorder %v305, 15
        %v339 = vsel %vm338, %v335, %v337
        %v340 = vsel %vm338, %v337, %v335
        %v341 = vperm.slane %v288, 2
        %v342 = vperm.slane %v289, 2
        %v343 = vmul.f32 %v340, %v341
        %v344 = vmul.f32 %v339, %v342
        %345 = vst [vmem:[#allocation1] ss:$2 sm:$0xff] %v287
        %v346 = vld.sshfl [vmem:[#allocation1] sm:$0xff pattern:$0x75316420]
        %v347 = vld.sshfl [vmem:[#allocation1 + $0x8] sm:$0xff pattern:$0x75316420]
        %350 = vrot.lane.b32.xlu0 %v346, 1
        %v351 = vpop.permute.xlu0 %350
        %352 = vrot.lane.b32.xlu0 %v347, 1
        %v353 = vpop.permute.xlu0 %352
        %vm354 = vcmp.lt.s32.totalorder %v305, 1
        %v355 = vsel %vm354, %v351, %v353
        %v356 = vsel %vm354, %v353, %v351
        %v357 = vperm.slane %v288, 3
        %v358 = vperm.slane %v289, 3
        %v359 = vmul.f32 %v356, %v357
        %v360 = vmul.f32 %v355, %v358
        %v361 = vperm.slane %v288, 4
        %v362 = vperm.slane %v289, 4
        %v365 = vrot.slane %v362, 4
        %vm366 = vcmask 1043456
        %v367 = vsel %vm366, %v361, %v365
        %v369 = vmul.f32 %v287, %v367
        %370 = vst [vmem:[#allocation1] ss:$2 sm:$0xff] %v287
        %v371 = vld.sshfl [vmem:[#allocation1] sm:$0xff pattern:$0x75316420]
        %v372 = vld.sshfl [vmem:[#allocation1 + $0x8] sm:$0xff pattern:$0x75316420]
        %375 = vrot.lane.b32.xlu0 %v371, 127
        %v376 = vpop.permute.xlu0 %375
        %377 = vrot.lane.b32.xlu0 %v372, 127
        %v378 = vpop.permute.xlu0 %377
        %vm379 = vcmp.lt.s32.totalorder %v305, 127
        %v380 = vsel %vm379, %v376, %v378
        %v381 = vsel %vm379, %v378, %v376
        %v382 = vperm.slane %v288, 5
        %v383 = vperm.slane %v289, 5
        %v384 = vmul.f32 %v380, %v382
        %v385 = vmul.f32 %v381, %v383
        %386 = vst [vmem:[#allocation1] ss:$2 sm:$0xff] %v287
        %v387 = vld.sshfl [vmem:[#allocation1] sm:$0xff pattern:$0x75316420]
        %v388 = vld.sshfl [vmem:[#allocation1 + $0x8] sm:$0xff pattern:$0x75316420]
        %391 = vrot.lane.b32.xlu0 %v387, 113
        %v392 = vpop.permute.xlu0 %391
        %393 = vrot.lane.b32.xlu0 %v388, 113
        %v394 = vpop.permute.xlu0 %393
        %vm395 = vcmp.lt.s32.totalorder %v305, 113
        %v396 = vsel %vm395, %v392, %v394
        %v397 = vsel %vm395, %v394, %v392
        %v398 = vperm.slane %v288, 6
        %v399 = vperm.slane %v289, 6
        %v400 = vmul.f32 %v396, %v398
        %v401 = vmul.f32 %v397, %v399
        %402 = vst [vmem:[#allocation1] ss:$2 sm:$0xff] %v287
        %v403 = vld.sshfl [vmem:[#allocation1] sm:$0xff pattern:$0x75316420]
        %v404 = vld.sshfl [vmem:[#allocation1 + $0x8] sm:$0xff pattern:$0x75316420]
        %407 = vrot.lane.b32.xlu0 %v403, 112
        %v408 = vpop.permute.xlu0 %407
        %409 = vrot.lane.b32.xlu0 %v404, 112
        %v410 = vpop.permute.xlu0 %409
        %vm411 = vcmp.lt.s32.totalorder %v305, 112
        %v412 = vsel %vm411, %v408, %v410
        %v413 = vsel %vm411, %v410, %v408
        %v414 = vperm.slane %v288, 7
        %v415 = vperm.slane %v289, 7
        %v416 = vmul.f32 %v412, %v414
        %v417 = vmul.f32 %v413, %v415
        %418 = vst [vmem:[#allocation1] ss:$2 sm:$0xff] %v287
        %v419 = vld.sshfl [vmem:[#allocation1] sm:$0xff pattern:$0x75316420]
        %v420 = vld.sshfl [vmem:[#allocation1 + $0x8] sm:$0xff pattern:$0x75316420]
        %423 = vrot.lane.b32.xlu0 %v419, 111
        %v424 = vpop.permute.xlu0 %423
        %425 = vrot.lane.b32.xlu0 %v420, 111
        %v426 = vpop.permute.xlu0 %425
        %vm427 = vcmp.lt.s32.totalorder %v305, 111
        %v428 = vsel %vm427, %v424, %v426
        %v429 = vsel %vm427, %v426, %v424
        %v430 = vperm.slane %v290, 0
        %v431 = vperm.slane %v291, 0
        %v432 = vmul.f32 %v428, %v430
        %v433 = vmul.f32 %v429, %v431
        %v436 = vrot.slane %v327, 4
        %v437 = vrot.slane %v328, 4
        %v442 = vrot.slane %v359, 4
        %v443 = vrot.slane %v360, 4
        %447 = vst [vmem:[#allocation1] ss:$2 sm:$0xff] %v369
        %v448 = vld.sshfl [vmem:[#allocation1] sm:$0xff pattern:$0x75316420]
        %v449 = vld.sshfl [vmem:[#allocation1 + $0x8] sm:$0xff pattern:$0x75316420]
        %v454 = vrot.slane %v384, 4
        %v455 = vrot.slane %v385, 4
        %v460 = vrot.slane %v416, 4
        %v461 = vrot.slane %v417, 4
        %v464 = vsel %vm366, %v311, %v436
        %v465 = vsel %vm366, %v312, %v437
        %v466 = vsel %vm366, %v343, %v442
        %v467 = vsel %vm366, %v344, %v443
        %v468 = vsel %vm366, %v448, %v454
        %v469 = vsel %vm366, %v449, %v455
        %v470 = vsel %vm366, %v400, %v460
        %v471 = vsel %vm366, %v401, %v461
        %473 = vset.pattern.permute.xlu0 0
        %474 = vperm.xlu0 %473, %v293
        %v475 = vpop.permute.xlu0 %474
        %vm477 = vcmask 293888
        %v479 = vsel %vm477, %v292, 0
        %v482 = vsel %vm366, %v432, 0
        %v485 = vsel %vm366, %v433, 0
        %487 = vmatpush.msra.mxu0 0.0
        %488 = vmatpush.msra.mxu0 0.0
        %489 = vmatpush.msra.mxu0 0.0
        %490 = vmatpush.msra.mxu0 0.0
        %491 = vmatpush.msra.mxu0 0.0
        %492 = vmatpush.msra.mxu0 0.0
        %493 = vmatpush.msra.mxu0 0.0
        %494 = vmatpush.msra.mxu0 0.0
        %495 = vmatpush.msra.mxu0 0.0
        %496 = vmatpush.msra.mxu0 0.0
        %497 = vmatpush.msra.mxu0 0.0
        %498 = vmatpush.msra.mxu0 %v482
        %499 = vmatpush.msra.mxu0 %v470
        %500 = vmatpush.msra.mxu0 %v468
        %501 = vmatpush.msra.mxu0 %v466
        %502 = vmatpush.msra.mxu0 %v464
        %503 = vmatmul.f32.gmra.mxu0 %v479
        %v504 = vpop.f32.mrf.mxu0
        %v505 = vadd.f32 %v475, %v504
        %506 = vdwg.mxu0
        %507 = vmatpush.msra.mxu0 0.0
        %508 = vmatpush.msra.mxu0 0.0
        %509 = vmatpush.msra.mxu0 0.0
        %510 = vmatpush.msra.mxu0 0.0
        %511 = vmatpush.msra.mxu0 0.0
        %512 = vmatpush.msra.mxu0 0.0
        %513 = vmatpush.msra.mxu0 0.0
        %514 = vmatpush.msra.mxu0 0.0
        %515 = vmatpush.msra.mxu0 0.0
        %516 = vmatpush.msra.mxu0 0.0
        %517 = vmatpush.msra.mxu0 0.0
        %518 = vmatpush.msra.mxu0 %v485
        %519 = vmatpush.msra.mxu0 %v471
        %520 = vmatpush.msra.mxu0 %v469
        %521 = vmatpush.msra.mxu0 %v467
        %522 = vmatpush.msra.mxu0 %v465
        %523 = vmatmul.f32.gmra.mxu0 %v479
        %v524 = vpop.f32.mrf.mxu0
        %v525 = vadd.f32 %v475, %v524
        %526 = vdwg.mxu0
        %v527 = vmax.f32 %v505, 0.0
        %v528 = vmax.f32 %v525, 0.0
        %v529 = vld [vmem:[%s4] sm:$0xf]
        %v530 = vld [vmem:[%s5] sm:$0xf]
        %531 = vrot.lane.b32.xlu0 %v527, 17
        %v532 = vpop.permute.xlu0 %531
        %533 = vrot.lane.b32.xlu0 %v528, 17
        %v534 = vpop.permute.xlu0 %533
        %v535 = vsel %vm306, %v532, %v534
        %v536 = vsel %vm306, %v534, %v532
        %v537 = vmul.f32 %v536, %v309
        %v538 = vmul.f32 %v535, %v310
        %539 = vrot.lane.b32.xlu0 %v527, 16
        %v540 = vpop.permute.xlu0 %539
        %541 = vrot.lane.b32.xlu0 %v528, 16
        %v542 = vpop.permute.xlu0 %541
        %v543 = vsel %vm322, %v540, %v542
        %v544 = vsel %vm322, %v542, %v540
        %v545 = vmul.f32 %v544, %v325
        %v546 = vmul.f32 %v543, %v326
        %547 = vrot.lane.b32.xlu0 %v527, 15
        %v548 = vpop.permute.xlu0 %547
        %549 = vrot.lane.b32.xlu0 %v528, 15
        %v550 = vpop.permute.xlu0 %549
        %v551 = vsel %vm338, %v548, %v550
        %v552 = vsel %vm338, %v550, %v548
        %v553 = vmul.f32 %v552, %v341
        %v554 = vmul.f32 %v551, %v342
        %555 = vrot.lane.b32.xlu0 %v527, 1
        %v556 = vpop.permute.xlu0 %555
        %557 = vrot.lane.b32.xlu0 %v528, 1
        %v558 = vpop.permute.xlu0 %557
        %v559 = vsel %vm354, %v556, %v558
        %v560 = vsel %vm354, %v558, %v556
        %v561 = vmul.f32 %v560, %v357
        %v562 = vmul.f32 %v559, %v358
        %v563 = vmul.f32 %v527, %v361
        %v564 = vmul.f32 %v528, %v362
        %565 = vrot.lane.b32.xlu0 %v527, 127
        %v566 = vpop.permute.xlu0 %565
        %567 = vrot.lane.b32.xlu0 %v528, 127
        %v568 = vpop.permute.xlu0 %567
        %v569 = vsel %vm379, %v566, %v568
        %v570 = vsel %vm379, %v568, %v566
        %v571 = vmul.f32 %v569, %v382
        %v572 = vmul.f32 %v570, %v383
        %573 = vrot.lane.b32.xlu0 %v527, 113
        %v574 = vpop.permute.xlu0 %573
        %575 = vrot.lane.b32.xlu0 %v528, 113
        %v576 = vpop.permute.xlu0 %575
        %v577 = vsel %vm395, %v574, %v576
        %v578 = vsel %vm395, %v576, %v574
        %v579 = vmul.f32 %v577, %v398
        %v580 = vmul.f32 %v578, %v399
        %581 = vrot.lane.b32.xlu0 %v527, 112
        %v582 = vpop.permute.xlu0 %581
        %583 = vrot.lane.b32.xlu0 %v528, 112
        %v584 = vpop.permute.xlu0 %583
        %v585 = vsel %vm411, %v582, %v584
        %v586 = vsel %vm411, %v584, %v582
        %v587 = vmul.f32 %v585, %v414
        %v588 = vmul.f32 %v586, %v415
        %589 = vrot.lane.b32.xlu0 %v527, 111
        %v590 = vpop.permute.xlu0 %589
        %591 = vrot.lane.b32.xlu0 %v528, 111
        %v592 = vpop.permute.xlu0 %591
        %v593 = vsel %vm427, %v590, %v592
        %v594 = vsel %vm427, %v592, %v590
        %v595 = vmul.f32 %v593, %v430
        %v596 = vmul.f32 %v594, %v431
        %v599 = vrot.slane %v545, 4
        %v600 = vrot.slane %v546, 4
        %v605 = vrot.slane %v561, 4
        %v606 = vrot.slane %v562, 4
        %v611 = vrot.slane %v571, 4
        %v612 = vrot.slane %v572, 4
        %v617 = vrot.slane %v587, 4
        %v618 = vrot.slane %v588, 4
        %v621 = vsel %vm366, %v537, %v599
        %v622 = vsel %vm366, %v538, %v600
        %v623 = vsel %vm366, %v553, %v605
        %v624 = vsel %vm366, %v554, %v606
        %v625 = vsel %vm366, %v563, %v611
        %v626 = vsel %vm366, %v564, %v612
        %v627 = vsel %vm366, %v579, %v617
        %v628 = vsel %vm366, %v580, %v618
        %630 = vset.pattern.permute.xlu0 0
        %631 = vperm.xlu0 %630, %v530
        %v632 = vpop.permute.xlu0 %631
        %v635 = vsel %vm477, %v529, 0
        %v638 = vsel %vm366, %v595, 0
        %v641 = vsel %vm366, %v596, 0
        %643 = vmatpush.msra.mxu0 0.0
        %644 = vmatpush.msra.mxu0 0.0
        %645 = vmatpush.msra.mxu0 0.0
        %646 = vmatpush.msra.mxu0 0.0
        %647 = vmatpush.msra.mxu0 0.0
        %648 = vmatpush.msra.mxu0 0.0
        %649 = vmatpush.msra.mxu0 0.0
        %650 = vmatpush.msra.mxu0 0.0
        %651 = vmatpush.msra.mxu0 0.0
        %652 = vmatpush.msra.mxu0 0.0
        %653 = vmatpush.msra.mxu0 0.0
        %654 = vmatpush.msra.mxu0 %v638
        %655 = vmatpush.msra.mxu0 %v627
        %656 = vmatpush.msra.mxu0 %v625
        %657 = vmatpush.msra.mxu0 %v623
        %658 = vmatpush.msra.mxu0 %v621
        %659 = vmatmul.f32.gmra.mxu0 %v635
        %v660 = vpop.f32.mrf.mxu0
        %v661 = vadd.f32 %v632, %v660
        %662 = vdwg.mxu0
        %663 = vmatpush.msra.mxu0 0.0
        %664 = vmatpush.msra.mxu0 0.0
        %665 = vmatpush.msra.mxu0 0.0
        %666 = vmatpush.msra.mxu0 0.0
        %667 = vmatpush.msra.mxu0 0.0
        %668 = vmatpush.msra.mxu0 0.0
        %669 = vmatpush.msra.mxu0 0.0
        %670 = vmatpush.msra.mxu0 0.0
        %671 = vmatpush.msra.mxu0 0.0
        %672 = vmatpush.msra.mxu0 0.0
        %673 = vmatpush.msra.mxu0 0.0
        %674 = vmatpush.msra.mxu0 %v641
        %675 = vmatpush.msra.mxu0 %v628
        %676 = vmatpush.msra.mxu0 %v626
        %677 = vmatpush.msra.mxu0 %v624
        %678 = vmatpush.msra.mxu0 %v622
        %679 = vmatmul.f32.gmra.mxu0 %v635
        %v680 = vpop.f32.mrf.mxu0
        %v681 = vadd.f32 %v632, %v680
        %682 = vdwg.mxu0
        %683 = vst [vmem:[#allocation1] ss:$2 sm:$0xff] %v287
        %v684 = vld.sshfl [vmem:[#allocation1] sm:$0xff pattern:$0x75316420]
        %v685 = vld.sshfl [vmem:[#allocation1 + $0x8] sm:$0xff pattern:$0x75316420]
        %v688 = vadd.f32 %v661, %v684
        %v689 = vadd.f32 %v681, %v685
        %v692 = vrot.slane %v689, 4
        %v693 = vsel %vm366, %v688, %v692
        %695 = vst [vmem:[%s286] sm:$0xff] %v693
        %s696 = sand.u32 %s163, 1
        %s697 = scalar_lea.sflag [#allocation4], %s696
        %s698 = sand.u32 %s163, 1
        %s699 = smul.addr %s698, 8
        %s700 = scalar_lea.vmem [#allocation7], %s699
        // Predicated region
        $region53: #{tpu_custom_call.1} parent=43 // pred_check
          %p701 = pneg %p173
        $region54: #{tpu_custom_call.1} parent=43 // pred_check_branch
          %703 = sbr.rel (%p701) target = $region56
        $region55: #{tpu_custom_call.1} parent=43 // pred_region
          %705 = vsyncadd %s697, 0
          %s706 = smul.addr %s24, 2
          %s707 = smul.addr %s706, 4
          %s708 = scalar_lea.hbm %s6, %s707
          %s710 = sshll.u32 %s700, 4
          %s711 = int_to_ptr.vmem [resolvable:$true] %s710
          %s712 = sshll.u32 %s708, 4
          %s713 = int_to_ptr.hbm [resolvable:$true] %s712
          %715 = dma.vmem_to_hbm [thread:$0]  %s711, 128, %s713, %s697
        $region56: #{tpu_custom_call.1} parent=43 // pred_fallthru
          _
      $region44: #{tpu_custom_call.1} parent=5 // pred_fallthru
        _
      %p716 = scmp.le.s32.totalorder 2, %s19
      // Predicated region
      $region57: #{tpu_custom_call.1} parent=5 // pred_check
        %p717 = pneg %p716
      $region58: #{tpu_custom_call.1} parent=5 // pred_check_branch
        %719 = sbr.rel (%p717) target = $region60
      $region59: #{tpu_custom_call.1} parent=5 // pred_region
        %s720 = ssub.s32 %s19, 2
        // Predicated region
        $region61: #{tpu_custom_call.1} parent=59 // pred_check
          %p721 = pneg %p179
        $region62: #{tpu_custom_call.1} parent=59 // pred_check_branch
          %723 = sbr.rel (%p721) target = $region64
        $region63: #{tpu_custom_call.1} parent=59 // pred_region
          %s724 = sand.u32 %s164, 1
          %s725 = scalar_lea.sflag [#allocation4], %s724
          %s726 = sand.u32 %s164, 1
          %s727 = smul.addr %s726, 8
          %s728 = scalar_lea.vmem [#allocation7], %s727
          %730 = dma.done %s725, 128
        $region64: #{tpu_custom_call.1} parent=59 // pred_fallthru
          _
      $region60: #{tpu_custom_call.1} parent=5 // pred_fallthru
        _
    $region6: #{tpu_custom_call.1} parent=1 // loop_footer
      %s23 = sadd.s32 1, %s19
    $region7: #{tpu_custom_call.1} parent=1 // loop_footer_branch
      %18 = sbr.rel target = $region3
    $region8: #{tpu_custom_call.1} parent=1 // loop_exit
      _
    %731 = vsyncpa [#allocation3], 1
    %s732 = scalar_lea.sflag [#allocation3], 1
    %733 = vsyncpa %s732, 1
    %734 = vsyncpa [#allocation6], 1
    %735 = vsyncpa [#allocation4], 1
    %s736 = scalar_lea.sflag [#allocation4], 1
    %737 = vsyncpa %s736, 1

</llo_original>
